<compile_context>
chip_gen: v5e
topology: v5e:2x2
jax: 0.10.0
libtpu: 0.0.40
codegen_flags: <defaults>
</compile_context>

<pallas_src>
import numpy as np
import jax
import jax.numpy as jnp
from jax import lax
from jax.experimental import pallas as pl
from jax.experimental.pallas import tpu as pltpu


def basic_block_kernel(x_ref, w1_ref, b1_ref, w2_ref, b2_ref, o_ref):
    """Bt images per grid step.

    x_ref : (Bt, S, L) bf16  activations, L = 2*W*C (lane-dense super-rows)
    w?_ref: (3*L, L)   bf16  banded conv weight with BN scale folded in
    b?_ref: (1, L)     f32   BN bias broadcast to the lane layout
    o_ref : (Bt, S, L) f32
    """
    Bt, S, L = x_ref.shape
    M = Bt * S
    x = x_ref[...]                                            # (Bt, S, L) bf16

    def band_conv3x3(h, w_ref, b_ref):
        # h is already bf16: build the +/-1 super-row shifts (zero rows at the
        # top/bottom image boundary) per image, then contract the whole batch
        # against the banded weight in a single MXU matmul.
        zero = jnp.zeros((Bt, 1, L), h.dtype)
        h_dn = jnp.concatenate([zero, h[:, :-1, :]], axis=1)  # row s -> h[s-1]
        h_up = jnp.concatenate([h[:, 1:, :], zero], axis=1)   # row s -> h[s+1]
        cat = jnp.concatenate(
            [h_dn.reshape(M, L), h.reshape(M, L), h_up.reshape(M, L)],
            axis=1)                                           # (M, 3L) bf16
        y = jnp.dot(cat, w_ref[...],
                    preferred_element_type=jnp.float32)       # (M, L) f32
        return y + b_ref[...]                                 # BN bias (f32)

    h1 = jnp.maximum(band_conv3x3(x, w1_ref, b1_ref), 0.0)    # conv1+bn1+relu
    h2 = band_conv3x3(h1.astype(x.dtype).reshape(Bt, S, L),
                      w2_ref, b2_ref)                         # conv2+bn2
    out = jnp.maximum(h2 + x.reshape(M, L).astype(jnp.float32), 0.0)
    o_ref[...] = out.reshape(Bt, S, L).astype(o_ref.dtype)


def _band_weight(w_oihw, scale, W):
    """Express a 3x3 / stride-1 / pad-1 conv (with BN scale folded into the
    output channels) as a banded matrix acting on lane-packed super-rows of
    two image rows.  Returns (3*L_in, L_out) where L = 2*W*C; block d
    (d = 0, 1, 2) multiplies the input super-row at offset d - 1.
    """
    w = np.asarray(w_oihw, np.float32)                     # (Cout, Cin, 3, 3)
    co_, ci_ = w.shape[0], w.shape[1]
    wt = w.transpose(2, 3, 1, 0) * np.asarray(scale, np.float32)[None, None, None, :]
    L_in, L_out = 2 * W * ci_, 2 * W * co_
    band = np.zeros((3, L_in, L_out), np.float32)
    for po in range(2):                                    # output row in group
        for kh in range(3):
            hrel = po + kh - 1                             # input row rel. group
            ds = (hrel + 2) // 2 - 1                       # super-row shift -1/0/+1
            pi = (hrel + 2) % 2                            # input row in group
            for wo in range(W):
                for kw in range(3):
                    wi = wo + kw - 1
                    if 0 <= wi < W:                        # W zero-padding baked in
                        ji = (pi * W + wi) * ci_
                        jo = (po * W + wo) * co_
                        band[ds + 1, ji:ji + ci_, jo:jo + co_] = wt[kh, kw]
    return band.reshape(3 * L_in, L_out)


def _pick_batch_tile(N, S, target_rows=256, min_rows=128):
    """Largest divisor Bt of N with Bt*S <= ~target_rows; prefer >= 2 grid
    steps (v7x megacore) when that keeps the matmul M dim >= min_rows."""
    want = max(1, min(N, -(-target_rows // S)))
    divs = [d for d in range(1, N + 1) if N % d == 0]
    bt = max(d for d in divs if d <= want)
    smaller = [d for d in divs if d < bt and d * S >= min_rows and N // d >= 2]
    if N // bt < 2 and smaller:
        bt = max(smaller)
    return bt


def basic_block(x_nchw, w1_oihw, bn1, w2_oihw, bn2, eps=1e-5):
    """bn1/bn2 = (gamma, beta, running_mean, running_var), each shape (planes,)."""
    N, C, H, W = x_nchw.shape
    Cout = w1_oihw.shape[0]
    assert Cout == C and w2_oihw.shape[0] == Cout, \
        "stride=1 / downsample=None BasicBlock requires inplanes == planes"
    assert H % 2 == 0, "super-row packing groups two image rows"
    S, L = H // 2, 2 * W * C
    assert L % 128 == 0, \
        f"lane-dense layout needs 2*W*C % 128 == 0, got {L}"

    Bt = _pick_batch_tile(N, S)
    n_steps = N // Bt

    # VMEM budget check (fail loudly before Mosaic OOMs): weights are
    # single-buffered; activation tiles are double-buffered by the pipeline.
    weight_bytes = 2 * (3 * L) * L * 2            # bf16, Buffered(1)
    bias_bytes = 2 * 2 * L * 4                    # f32, double-buffered
    act_bytes = 2 * Bt * S * L * (2 + 4)          # bf16 in + f32 out, 2 bufs
    vmem_bytes = weight_bytes + bias_bytes + act_bytes
    assert vmem_bytes < 24 * 1024 * 1024, \
        f"~{vmem_bytes/2**20:.1f} MiB of VMEM tiles: K-tile the band weight"

    def fold_bn(gamma, beta, mean, var):
        scale = np.asarray(gamma, np.float32) / np.sqrt(np.asarray(var, np.float32) + eps)
        bias = np.asarray(beta, np.float32) - np.asarray(mean, np.float32) * scale
        return scale, bias

    s1, b1 = fold_bn(*bn1)
    s2, b2 = fold_bn(*bn2)

    # BN scale folded into the conv weights; MXU operands in bf16.
    w1_band = jnp.asarray(_band_weight(w1_oihw, s1, W), jnp.bfloat16)
    w2_band = jnp.asarray(_band_weight(w2_oihw, s2, W), jnp.bfloat16)
    b1_lane = jnp.asarray(np.tile(b1, 2 * W).reshape(1, L), jnp.float32)
    b2_lane = jnp.asarray(np.tile(b2, 2 * W).reshape(1, L), jnp.float32)

    # NCHW -> NHWC -> lane-dense (N, S, 2*W*C) super-rows, bf16 for DMA/MXU.
    x = jnp.transpose(x_nchw, (0, 2, 3, 1)).reshape(N, S, L).astype(jnp.bfloat16)

    out = pl.pallas_call(
        basic_block_kernel,
        out_shape=jax.ShapeDtypeStruct((N, S, L), jnp.float32),
        grid=(n_steps,),
        in_specs=[
            pl.BlockSpec((Bt, S, L), lambda n: (n, 0, 0)),   # Bt images / step
            pl.BlockSpec((3 * L, L), lambda n: (0, 0),       # band weight 1
                         pipeline_mode=pl.Buffered(1)),      #   (resident)
            pl.BlockSpec((1, L), lambda n: (0, 0)),          # bias 1
            pl.BlockSpec((3 * L, L), lambda n: (0, 0),       # band weight 2
                         pipeline_mode=pl.Buffered(1)),      #   (resident)
            pl.BlockSpec((1, L), lambda n: (0, 0)),          # bias 2
        ],
        out_specs=pl.BlockSpec((Bt, S, L), lambda n: (n, 0, 0)),
        compiler_params=pltpu.CompilerParams(
            dimension_semantics=("parallel",)),
    )(x, w1_band, b1_lane, w2_band, b2_lane)

    # (N, S, L) -> NHWC -> NCHW
    return jnp.transpose(out.reshape(N, H, W, C), (0, 3, 1, 2))


def ref_basic_block(x, w1, bn1, w2, bn2, eps=1e-5):
    """Pure-JAX f32 reference (NCHW), inference-mode BN."""
    def bn(y, gamma, beta, mean, var):
        g = gamma.reshape(1, -1, 1, 1)
        b = beta.reshape(1, -1, 1, 1)
        m = mean.reshape(1, -1, 1, 1)
        v = var.reshape(1, -1, 1, 1)
        return (y - m) / jnp.sqrt(v + eps) * g + b

    def conv(y, w):
        return lax.conv_general_dilated(
            y, w, window_strides=(1, 1), padding=((1, 1), (1, 1)),
            dimension_numbers=('NCHW', 'OIHW', 'NCHW'))

    out = jax.nn.relu(bn(conv(x, w1), *bn1))
    out = bn(conv(out, w2), *bn2)
    return jax.nn.relu(out + x)


if __name__ == "__main__":
    key = jax.random.PRNGKey(0)
    kx, k1, k2 = jax.random.split(key, 3)

    # BasicBlock(inplanes=4, planes=4, stride=1, downsample=None)
    N, C, H, W = 2, 4, 16, 16
    x = jax.random.normal(kx, (N, C, H, W), jnp.float32)
    w1 = 0.1 * jax.random.normal(k1, (C, C, 3, 3), jnp.float32)   # conv1 (OIHW)
    w2 = 0.1 * jax.random.normal(k2, (C, C, 3, 3), jnp.float32)   # conv2 (OIHW)

    # Deterministic BatchNorm parameters / running stats (inference mode).
    ar = jnp.arange(C, dtype=jnp.float32)
    bn1 = (1.0 + 0.10 * ar, 0.01 * ar, 0.05 * ar, 1.0 + 0.10 * ar)
    bn2 = (1.0 - 0.05 * ar, -0.02 * ar, 0.03 * ar, 1.0 + 0.20 * ar)

    out = basic_block(x, w1, bn1, w2, bn2)
    jax.block_until_ready(out)

    ref = ref_basic_block(x, w1, bn1, w2, bn2)
    # Activations/MXU operands are bf16 (f32 accumulation) -> bf16-level tol.
    np.testing.assert_allclose(np.asarray(out), np.asarray(ref),
                               atol=5e-2, rtol=5e-2)
    print("KERNEL_OK")
</pallas_src>

<mosaic_0001>
module attributes {stable_mosaic.version = 11 : i64} {
  func.func @basic_block_kernel(%arg0: i32, %arg1: memref<2x8x128xbf16, #tpu.memory_space<vmem>>, %arg2: memref<384x128xbf16, #tpu.memory_space<vmem>>, %arg3: memref<1x128xf32, #tpu.memory_space<vmem>>, %arg4: memref<384x128xbf16, #tpu.memory_space<vmem>>, %arg5: memref<1x128xf32, #tpu.memory_space<vmem>>, %arg6: memref<2x8x128xf32, #tpu.memory_space<vmem>>) attributes {dimension_semantics = [#tpu.dimension_semantics<parallel>], iteration_bounds = array<i64: 1>, scalar_prefetch = 0 : i64, scratch_operands = 0 : i64, tpu.core_type = #tpu.core_type<tc>, window_params = [{transform_indices = @transform_0, window_bounds = array<i64: 2, 8, 128>}, {pipeline_mode = #tpu.pipeline_mode<synchronous>, transform_indices = @transform_1, window_bounds = array<i64: 384, 128>}, {pipeline_mode = #tpu.pipeline_mode<synchronous>, transform_indices = @transform_2, window_bounds = array<i64: 1, 128>}, {pipeline_mode = #tpu.pipeline_mode<synchronous>, transform_indices = @transform_3, window_bounds = array<i64: 384, 128>}, {pipeline_mode = #tpu.pipeline_mode<synchronous>, transform_indices = @transform_4, window_bounds = array<i64: 1, 128>}, {transform_indices = @transform_5, window_bounds = array<i64: 2, 8, 128>}]} {
    %c0 = arith.constant 0 : index
    %c0_0 = arith.constant 0 : index
    %c0_1 = arith.constant 0 : index
    %0 = vector.load %arg1[%c0, %c0_0, %c0_1] : memref<2x8x128xbf16, #tpu.memory_space<vmem>>, vector<2x8x128xbf16>
    %cst = arith.constant 0.000000e+00 : bf16
    %1 = vector.broadcast %cst : bf16 to vector<2x1x128xbf16>
    %2 = vector.extract_strided_slice %0 {offsets = [0, 0, 0], sizes = [2, 7, 128], strides = [1, 1, 1]} : vector<2x8x128xbf16> to vector<2x7x128xbf16>
    %3 = tpu.concatenate %1, %2 in 1 : vector<2x1x128xbf16>, vector<2x7x128xbf16> -> vector<2x8x128xbf16>
    %4 = vector.extract_strided_slice %0 {offsets = [0, 1, 0], sizes = [2, 7, 128], strides = [1, 1, 1]} : vector<2x8x128xbf16> to vector<2x7x128xbf16>
    %5 = tpu.concatenate %4, %1 in 1 : vector<2x7x128xbf16>, vector<2x1x128xbf16> -> vector<2x8x128xbf16>
    %6 = vector.shape_cast %3 : vector<2x8x128xbf16> to vector<16x128xbf16>
    %7 = vector.shape_cast %0 : vector<2x8x128xbf16> to vector<16x128xbf16>
    %8 = vector.shape_cast %5 : vector<2x8x128xbf16> to vector<16x128xbf16>
    %9 = tpu.concatenate %6, %7, %8 in 1 : vector<16x128xbf16>, vector<16x128xbf16>, vector<16x128xbf16> -> vector<16x384xbf16>
    %c0_2 = arith.constant 0 : index
    %c0_3 = arith.constant 0 : index
    %10 = vector.load %arg2[%c0_2, %c0_3] : memref<384x128xbf16, #tpu.memory_space<vmem>>, vector<384x128xbf16>
    %cst_4 = arith.constant dense<0.000000e+00> : vector<16x128xf32>
    %11 = tpu.matmul %9, %10, %cst_4 {dimension_numbers = #tpu.dot_dimension_numbers<[1], [0], [0], [1], [0, 0, 1, 1], [], []>} : vector<16x384xbf16>, vector<384x128xbf16>, vector<16x128xf32> -> vector<16x128xf32>
    %c0_5 = arith.constant 0 : index
    %c0_6 = arith.constant 0 : index
    %12 = vector.load %arg3[%c0_5, %c0_6] : memref<1x128xf32, #tpu.memory_space<vmem>>, vector<1x128xf32>
    %13 = vector.broadcast %12 : vector<1x128xf32> to vector<16x128xf32>
    %14 = arith.addf %11, %13 : vector<16x128xf32>
    %cst_7 = arith.constant 0.000000e+00 : f32
    %15 = vector.broadcast %cst_7 : f32 to vector<16x128xf32>
    %16 = arith.maximumf %14, %15 : vector<16x128xf32>
    %17 = arith.truncf %16 : vector<16x128xf32> to vector<16x128xbf16>
    %18 = vector.shape_cast %17 : vector<16x128xbf16> to vector<2x8x128xbf16>
    %cst_8 = arith.constant 0.000000e+00 : bf16
    %19 = vector.broadcast %cst_8 : bf16 to vector<2x1x128xbf16>
    %20 = vector.extract_strided_slice %18 {offsets = [0, 0, 0], sizes = [2, 7, 128], strides = [1, 1, 1]} : vector<2x8x128xbf16> to vector<2x7x128xbf16>
    %21 = tpu.concatenate %19, %20 in 1 : vector<2x1x128xbf16>, vector<2x7x128xbf16> -> vector<2x8x128xbf16>
    %22 = vector.extract_strided_slice %18 {offsets = [0, 1, 0], sizes = [2, 7, 128], strides = [1, 1, 1]} : vector<2x8x128xbf16> to vector<2x7x128xbf16>
    %23 = tpu.concatenate %22, %19 in 1 : vector<2x7x128xbf16>, vector<2x1x128xbf16> -> vector<2x8x128xbf16>
    %24 = vector.shape_cast %21 : vector<2x8x128xbf16> to vector<16x128xbf16>
    %25 = vector.shape_cast %18 : vector<2x8x128xbf16> to vector<16x128xbf16>
    %26 = vector.shape_cast %23 : vector<2x8x128xbf16> to vector<16x128xbf16>
    %27 = tpu.concatenate %24, %25, %26 in 1 : vector<16x128xbf16>, vector<16x128xbf16>, vector<16x128xbf16> -> vector<16x384xbf16>
    %c0_9 = arith.constant 0 : index
    %c0_10 = arith.constant 0 : index
    %28 = vector.load %arg4[%c0_9, %c0_10] : memref<384x128xbf16, #tpu.memory_space<vmem>>, vector<384x128xbf16>
    %cst_11 = arith.constant dense<0.000000e+00> : vector<16x128xf32>
    %29 = tpu.matmul %27, %28, %cst_11 {dimension_numbers = #tpu.dot_dimension_numbers<[1], [0], [0], [1], [0, 0, 1, 1], [], []>} : vector<16x384xbf16>, vector<384x128xbf16>, vector<16x128xf32> -> vector<16x128xf32>
    %c0_12 = arith.constant 0 : index
    %c0_13 = arith.constant 0 : index
    %30 = vector.load %arg5[%c0_12, %c0_13] : memref<1x128xf32, #tpu.memory_space<vmem>>, vector<1x128xf32>
    %31 = vector.broadcast %30 : vector<1x128xf32> to vector<16x128xf32>
    %32 = arith.addf %29, %31 : vector<16x128xf32>
    %33 = vector.shape_cast %0 : vector<2x8x128xbf16> to vector<16x128xbf16>
    %34 = arith.extf %33 : vector<16x128xbf16> to vector<16x128xf32>
    %35 = arith.addf %32, %34 : vector<16x128xf32>
    %cst_14 = arith.constant 0.000000e+00 : f32
    %36 = vector.broadcast %cst_14 : f32 to vector<16x128xf32>
    %37 = arith.maximumf %35, %36 : vector<16x128xf32>
    %38 = vector.shape_cast %37 : vector<16x128xf32> to vector<2x8x128xf32>
    %c0_15 = arith.constant 0 : index
    %c0_16 = arith.constant 0 : index
    %c0_17 = arith.constant 0 : index
    %39 = vector.load %arg6[%c0_15, %c0_16, %c0_17] : memref<2x8x128xf32, #tpu.memory_space<vmem>>, vector<2x8x128xf32>
    tpu.vector_store %arg6[%c0_15, %c0_16, %c0_17], %38 {strides = array<i32>} : memref<2x8x128xf32, #tpu.memory_space<vmem>>, vector<2x8x128xf32>,
    return
  }
  func.func @transform_0(%arg0: i32) -> (i32, i32, i32) {
    %c0_i32 = arith.constant 0 : i32
    %c0_i32_0 = arith.constant 0 : i32
    %c0_i32_1 = arith.constant 0 : i32
    return %arg0, %c0_i32, %c0_i32_0 : i32, i32, i32
  }
  func.func @transform_1(%arg0: i32) -> (i32, i32) {
    %c0_i32 = arith.constant 0 : i32
    %c0_i32_0 = arith.constant 0 : i32
    %c0_i32_1 = arith.constant 0 : i32
    return %c0_i32, %c0_i32_0 : i32, i32
  }
  func.func @transform_2(%arg0: i32) -> (i32, i32) {
    %c0_i32 = arith.constant 0 : i32
    %c0_i32_0 = arith.constant 0 : i32
    %c0_i32_1 = arith.constant 0 : i32
    return %c0_i32, %c0_i32_0 : i32, i32
  }
  func.func @transform_3(%arg0: i32) -> (i32, i32) {
    %c0_i32 = arith.constant 0 : i32
    %c0_i32_0 = arith.constant 0 : i32
    %c0_i32_1 = arith.constant 0 : i32
    return %c0_i32, %c0_i32_0 : i32, i32
  }
  func.func @transform_4(%arg0: i32) -> (i32, i32) {
    %c0_i32 = arith.constant 0 : i32
    %c0_i32_0 = arith.constant 0 : i32
    %c0_i32_1 = arith.constant 0 : i32
    return %c0_i32, %c0_i32_0 : i32, i32
  }
  func.func @transform_5(%arg0: i32) -> (i32, i32, i32) {
    %c0_i32 = arith.constant 0 : i32
    %c0_i32_0 = arith.constant 0 : i32
    %c0_i32_1 = arith.constant 0 : i32
    return %arg0, %c0_i32, %c0_i32_0 : i32, i32, i32
  }
}

</mosaic_0001>

<llo_original>
// kernel: tpu_custom_call.1
$region0: #{tpu_custom_call.1}
  #allocation0 [shape = 'u32[]', space=smem, size = 0x4, offset = 0x4, fixed_abs, tag = 'smem constant byte address 0x4 - core index']
  #allocation1 [shape = 'u32[72,128]{1,0:T(1,128)}', space=vmem, size = 0x9000, scoped, tag = 'internal scratch']
  %s0 = inlined_call_operand.hbm [shape: bf16[2,8,128], index: 0, kind: input, shape index: {}]
  %s1 = inlined_call_operand.hbm [shape: bf16[384,128], index: 1, kind: input, shape index: {}]
  %s2 = inlined_call_operand.vmem [shape: f32[1,128], index: 2, kind: input, shape index: {}]
  %s3 = inlined_call_operand.hbm [shape: bf16[384,128], index: 3, kind: input, shape index: {}]
  %s4 = inlined_call_operand.vmem [shape: f32[1,128], index: 4, kind: input, shape index: {}]
  %s5 = inlined_call_operand.hbm [shape: f32[2,8,128], index: 5, kind: output, shape index: {}]
  %s6 = sld [smem:[#allocation0]]
  $region42: #{tpu_custom_call.1} parent=0
    _
  %s8 = ssub.s32 1, %s6
  %s9 = scalar_select 0, %s8, %s6
  $region1: #{tpu_custom_call.1} parent=0
    #allocation2 [shape = 'u8[4096]{0}', space=vmem, size = 0x1000, scoped, tag = 'input window, operand 0, single buffered']
    #allocation3 [shape = 's32[1]{0}', space=sflag, size = 0x4, scoped, tag = 'scoped memory for tpu_custom_call.1']
    #allocation4 [shape = 's32[1]{0}', space=sflag, size = 0x4, scoped, tag = 'scoped memory for tpu_custom_call.1']
    #allocation5 [shape = 'u8[98304]{0}', space=vmem, size = 0x18000, scoped, tag = 'input window, operand 1, single buffered']
    #allocation6 [shape = 's32[1]{0}', space=sflag, size = 0x4, scoped, tag = 'scoped memory for tpu_custom_call.1']
    #allocation7 [shape = 'u8[98304]{0}', space=vmem, size = 0x18000, scoped, tag = 'input window, operand 3, single buffered']
    #allocation8 [shape = 'u8[8192]{0}', space=vmem, size = 0x2000, scoped, tag = 'output window, operand 0, single buffered']
    %10 = vsyncpa [#allocation3], 0
    %11 = vsyncpa [#allocation6], 0
    %12 = vsyncpa [#allocation4], 0
    // Predicated region
    $region2: #{tpu_custom_call.1} parent=1 // pred_check
      _
    $region3: #{tpu_custom_call.1} parent=1 // pred_check_branch
      %14 = sbr.rel (0) target = $region5
    $region4: #{tpu_custom_call.1} parent=1 // pred_region
      %16 = vsyncadd [#allocation3], 0
      %s17 = sshll.u32 %s0, 4
      %s18 = int_to_ptr.hbm [resolvable:$true] %s17
      %s19 = sshll.u32 [#allocation2], 4
      %s20 = int_to_ptr.vmem [resolvable:$true] %s19
      %25 = dma.hbm_to_vmem [thread:$0]  %s18, 128, %s20, [#allocation3], 64, 64, 4
    $region5: #{tpu_custom_call.1} parent=1 // pred_fallthru
      _
    // Predicated region
    $region6: #{tpu_custom_call.1} parent=1 // pred_check
      _
    $region7: #{tpu_custom_call.1} parent=1 // pred_check_branch
      %27 = sbr.rel (0) target = $region9
    $region8: #{tpu_custom_call.1} parent=1 // pred_region
      %29 = vsyncadd [#allocation6], 0
      %s30 = sshll.u32 %s1, 4
      %s31 = int_to_ptr.hbm [resolvable:$true] %s30
      %s32 = sshll.u32 [#allocation5], 4
      %s33 = int_to_ptr.vmem [resolvable:$true] %s32
      %38 = dma.hbm_to_vmem [thread:$0]  %s31, 3072, %s33, [#allocation6], 64, 64, 4
    $region9: #{tpu_custom_call.1} parent=1 // pred_fallthru
      _
    // Predicated region
    $region10: #{tpu_custom_call.1} parent=1 // pred_check
      _
    $region11: #{tpu_custom_call.1} parent=1 // pred_check_branch
      %40 = sbr.rel (0) target = $region13
    $region12: #{tpu_custom_call.1} parent=1 // pred_region
      _
    $region13: #{tpu_custom_call.1} parent=1 // pred_fallthru
      _
    // Predicated region
    $region14: #{tpu_custom_call.1} parent=1 // pred_check
      _
    $region15: #{tpu_custom_call.1} parent=1 // pred_check_branch
      %42 = sbr.rel (0) target = $region17
    $region16: #{tpu_custom_call.1} parent=1 // pred_region
      %44 = vsyncadd [#allocation6], 0
      %s45 = sshll.u32 %s3, 4
      %s46 = int_to_ptr.hbm [resolvable:$true] %s45
      %s47 = sshll.u32 [#allocation7], 4
      %s48 = int_to_ptr.vmem [resolvable:$true] %s47
      %53 = dma.hbm_to_vmem [thread:$0]  %s46, 3072, %s48, [#allocation6], 64, 64, 4
    $region17: #{tpu_custom_call.1} parent=1 // pred_fallthru
      _
    // Predicated region
    $region18: #{tpu_custom_call.1} parent=1 // pred_check
      _
    $region19: #{tpu_custom_call.1} parent=1 // pred_check_branch
      %55 = sbr.rel (0) target = $region21
    $region20: #{tpu_custom_call.1} parent=1 // pred_region
      _
    $region21: #{tpu_custom_call.1} parent=1 // pred_fallthru
      _
    // Predicated region
    $region22: #{tpu_custom_call.1} parent=1 // pred_check
      _
    $region23: #{tpu_custom_call.1} parent=1 // pred_check_branch
      %57 = sbr.rel (0) target = $region25
    $region24: #{tpu_custom_call.1} parent=1 // pred_region
      %59 = dma.done [#allocation3], 128
    $region25: #{tpu_custom_call.1} parent=1 // pred_fallthru
      _
    // Predicated region
    $region26: #{tpu_custom_call.1} parent=1 // pred_check
      _
    $region27: #{tpu_custom_call.1} parent=1 // pred_check_branch
      %61 = sbr.rel (0) target = $region29
    $region28: #{tpu_custom_call.1} parent=1 // pred_region
      %63 = dma.done [#allocation6], 3072
    $region29: #{tpu_custom_call.1} parent=1 // pred_fallthru
      _
    // Predicated region
    $region30: #{tpu_custom_call.1} parent=1 // pred_check
      _
    $region31: #{tpu_custom_call.1} parent=1 // pred_check_branch
      %65 = sbr.rel (0) target = $region33
    $region32: #{tpu_custom_call.1} parent=1 // pred_region
      %67 = dma.done [#allocation6], 3072
    $region33: #{tpu_custom_call.1} parent=1 // pred_fallthru
      _
    %v69 = vld [vmem:[#allocation2] sm:$0xf]
    %v70 = vld [vmem:[#allocation2 + $0x4] sm:$0xf]
    %v73 = vunpack.c.l.b16 %v69
    %v74 = vunpack.c.l.b16 %v70
    %v75 = vpack.c.b16 %v73, %v73
    %v76 = vpack.c.b16 %v74, %v74
    %v78 = vshrl.u32 %v75, 16
    %v80 = vrot.slane %v78, 7
    %v81 = vshll.u32 %v75, 16
    %v83 = vor.u32 %v80, %v81
    %v85 = vshrl.u32 %v76, 16
    %v87 = vrot.slane %v85, 7
    %v88 = vshll.u32 %v76, 16
    %v90 = vor.u32 %v87, %v88
    %vm93 = vcmask 1040384
    %vm94 = vsmask.f32 256
    %vm95 = vmand %vm93, %vm94
    %v96 = vsel %vm95, 0, %v83
    %v97 = vsel %vm95, 0, %v90
    %v98 = vrot.slane %v81, 1
    %v99 = vor.u32 %v78, %v98
    %v100 = vrot.slane %v88, 1
    %v101 = vor.u32 %v85, %v100
    %vm104 = vcmask 1043456
    %vm105 = vsmask.f32 3328
    %vm106 = vmand %vm104, %vm105
    %v107 = vsel %vm106, %v99, 0
    %v108 = vsel %vm106, %v101, 0
    %v111 = vunpack.c.l.b16 %v96
    %v112 = vunpack.c.l.b16 %v97
    %v113 = vpack.c.b16 %v112, %v111
    %v115 = vpack.c.b16 %v74, %v73
    %v119 = vunpack.c.l.b16 %v107
    %v120 = vunpack.c.l.b16 %v108
    %v121 = vpack.c.b16 %v120, %v119
    %v123 = vld [vmem:[#allocation5] sm:$0xf]
    %v124 = vld [vmem:[#allocation5 + $0x4] sm:$0xf]
    %v125 = vld [vmem:[#allocation5 + $0x8] sm:$0xf]
    %v126 = vld [vmem:[#allocation5 + $0xc] sm:$0xf]
    %v127 = vld [vmem:[#allocation5 + $0x10] sm:$0xf]
    %v128 = vld [vmem:[#allocation5 + $0x14] sm:$0xf]
    %v129 = vld [vmem:[#allocation5 + $0x18] sm:$0xf]
    %v130 = vld [vmem:[#allocation5 + $0x1c] sm:$0xf]
    %v131 = vld [vmem:[#allocation5 + $0x20] sm:$0xf]
    %v132 = vld [vmem:[#allocation5 + $0x24] sm:$0xf]
    %v133 = vld [vmem:[#allocation5 + $0x28] sm:$0xf]
    %v134 = vld [vmem:[#allocation5 + $0x2c] sm:$0xf]
    %v135 = vld [vmem:[#allocation5 + $0x30] sm:$0xf]
    %v136 = vld [vmem:[#allocation5 + $0x34] sm:$0xf]
    %v137 = vld [vmem:[#allocation5 + $0x38] sm:$0xf]
    %v138 = vld [vmem:[#allocation5 + $0x3c] sm:$0xf]
    %v139 = vld [vmem:[#allocation5 + $0x40] sm:$0xf]
    %v140 = vld [vmem:[#allocation5 + $0x44] sm:$0xf]
    %v141 = vld [vmem:[#allocation5 + $0x48] sm:$0xf]
    %v142 = vld [vmem:[#allocation5 + $0x4c] sm:$0xf]
    %v143 = vld [vmem:[#allocation5 + $0x50] sm:$0xf]
    %v144 = vld [vmem:[#allocation5 + $0x54] sm:$0xf]
    %v145 = vld [vmem:[#allocation5 + $0x58] sm:$0xf]
    %v146 = vld [vmem:[#allocation5 + $0x5c] sm:$0xf]
    %v147 = vld [vmem:[#allocation5 + $0x60] sm:$0xf]
    %v148 = vld [vmem:[#allocation5 + $0x64] sm:$0xf]
    %v149 = vld [vmem:[#allocation5 + $0x68] sm:$0xf]
    %v150 = vld [vmem:[#allocation5 + $0x6c] sm:$0xf]
    %v151 = vld [vmem:[#allocation5 + $0x70] sm:$0xf]
    %v152 = vld [vmem:[#allocation5 + $0x74] sm:$0xf]
    %v153 = vld [vmem:[#allocation5 + $0x78] sm:$0xf]
    %v154 = vld [vmem:[#allocation5 + $0x7c] sm:$0xf]
    %v155 = vld [vmem:[#allocation5 + $0x80] sm:$0xf]
    %v156 = vld [vmem:[#allocation5 + $0x84] sm:$0xf]
    %v157 = vld [vmem:[#allocation5 + $0x88] sm:$0xf]
    %v158 = vld [vmem:[#allocation5 + $0x8c] sm:$0xf]
    %v159 = vld [vmem:[#allocation5 + $0x90] sm:$0xf]
    %v160 = vld [vmem:[#allocation5 + $0x94] sm:$0xf]
    %v161 = vld [vmem:[#allocation5 + $0x98] sm:$0xf]
    %v162 = vld [vmem:[#allocation5 + $0x9c] sm:$0xf]
    %v163 = vld [vmem:[#allocation5 + $0xa0] sm:$0xf]
    %v164 = vld [vmem:[#allocation5 + $0xa4] sm:$0xf]
    %v165 = vld [vmem:[#allocation5 + $0xa8] sm:$0xf]
    %v166 = vld [vmem:[#allocation5 + $0xac] sm:$0xf]
    %v167 = vld [vmem:[#allocation5 + $0xb0] sm:$0xf]
    %v168 = vld [vmem:[#allocation5 + $0xb4] sm:$0xf]
    %v169 = vld [vmem:[#allocation5 + $0xb8] sm:$0xf]
    %v170 = vld [vmem:[#allocation5 + $0xbc] sm:$0xf]
    %v171 = vld [vmem:[%s2] sm:$0x1]
    %v173 = vperm.slane %v171, 0
    %v223 = vunpack.c.l.b16 %v123
    %v224 = vunpack.c.l.b16 %v124
    %v225 = vunpack.c.l.b16 %v125
    %v226 = vunpack.c.l.b16 %v126
    %v227 = vunpack.c.l.b16 %v127
    %v228 = vunpack.c.l.b16 %v128
    %v229 = vunpack.c.l.b16 %v129
    %v230 = vunpack.c.l.b16 %v130
    %v231 = vunpack.c.l.b16 %v131
    %v232 = vunpack.c.l.b16 %v132
    %v233 = vunpack.c.l.b16 %v133
    %v234 = vunpack.c.l.b16 %v134
    %v235 = vunpack.c.l.b16 %v135
    %v236 = vunpack.c.l.b16 %v136
    %v237 = vunpack.c.l.b16 %v137
    %v238 = vunpack.c.l.b16 %v138
    %v239 = vunpack.c.l.b16 %v139
    %v240 = vunpack.c.l.b16 %v140
    %v241 = vunpack.c.l.b16 %v141
    %v242 = vunpack.c.l.b16 %v142
    %v243 = vunpack.c.l.b16 %v143
    %v244 = vunpack.c.l.b16 %v144
    %v245 = vunpack.c.l.b16 %v145
    %v246 = vunpack.c.l.b16 %v146
    %v247 = vunpack.c.l.b16 %v147
    %v248 = vunpack.c.l.b16 %v148
    %v249 = vunpack.c.l.b16 %v149
    %v250 = vunpack.c.l.b16 %v150
    %v251 = vunpack.c.l.b16 %v151
    %v252 = vunpack.c.l.b16 %v152
    %v253 = vunpack.c.l.b16 %v153
    %v254 = vunpack.c.l.b16 %v154
    %v255 = vunpack.c.l.b16 %v155
    %v256 = vunpack.c.l.b16 %v156
    %v257 = vunpack.c.l.b16 %v157
    %v258 = vunpack.c.l.b16 %v158
    %v259 = vunpack.c.l.b16 %v159
    %v260 = vunpack.c.l.b16 %v160
    %v261 = vunpack.c.l.b16 %v161
    %v262 = vunpack.c.l.b16 %v162
    %v263 = vunpack.c.l.b16 %v163
    %v264 = vunpack.c.l.b16 %v164
    %v265 = vunpack.c.l.b16 %v165
    %v266 = vunpack.c.l.b16 %v166
    %v267 = vunpack.c.l.b16 %v167
    %v268 = vunpack.c.l.b16 %v168
    %v269 = vunpack.c.l.b16 %v169
    %v270 = vunpack.c.l.b16 %v170
    %v271 = vpack.c.b16 %v224, %v223
    %v272 = vpack.c.b16 %v226, %v225
    %v273 = vpack.c.b16 %v228, %v227
    %v274 = vpack.c.b16 %v230, %v229
    %v275 = vpack.c.b16 %v232, %v231
    %v276 = vpack.c.b16 %v234, %v233
    %v277 = vpack.c.b16 %v236, %v235
    %v278 = vpack.c.b16 %v238, %v237
    %v279 = vpack.c.b16 %v240, %v239
    %v280 = vpack.c.b16 %v242, %v241
    %v281 = vpack.c.b16 %v244, %v243
    %v282 = vpack.c.b16 %v246, %v245
    %v283 = vpack.c.b16 %v248, %v247
    %v284 = vpack.c.b16 %v250, %v249
    %v285 = vpack.c.b16 %v252, %v251
    %v286 = vpack.c.b16 %v254, %v253
    %v287 = vpack.c.b16 %v256, %v255
    %v288 = vpack.c.b16 %v258, %v257
    %v289 = vpack.c.b16 %v260, %v259
    %v290 = vpack.c.b16 %v262, %v261
    %v291 = vpack.c.b16 %v264, %v263
    %v292 = vpack.c.b16 %v266, %v265
    %v293 = vpack.c.b16 %v268, %v267
    %v294 = vpack.c.b16 %v270, %v269
    %319 = vmatpush.bf16.msra.mxu0 %v278
    %320 = vmatpush.bf16.msra.mxu0 %v277
    %321 = vmatpush.bf16.msra.mxu0 %v276
    %322 = vmatpush.bf16.msra.mxu0 %v275
    %323 = vmatpush.bf16.msra.mxu0 %v274
    %324 = vmatpush.bf16.msra.mxu0 %v273
    %325 = vmatpush.bf16.msra.mxu0 %v272
    %326 = vmatpush.bf16.msra.mxu0 %v271
    %327 = vmatmul.bf16.gmra.mxu0 %v113
    %v328 = vpop.f32.mrf.mxu0
    %v329 = vadd.f32 %v173, %v328
    %v330 = vpop.f32.mrf.mxu0
    %v331 = vadd.f32 %v173, %v330
    %332 = vdwg.mxu0
    %333 = vmatpush.bf16.msra.mxu0 %v286
    %334 = vmatpush.bf16.msra.mxu0 %v285
    %335 = vmatpush.bf16.msra.mxu0 %v284
    %336 = vmatpush.bf16.msra.mxu0 %v283
    %337 = vmatpush.bf16.msra.mxu0 %v282
    %338 = vmatpush.bf16.msra.mxu0 %v281
    %339 = vmatpush.bf16.msra.mxu0 %v280
    %340 = vmatpush.bf16.msra.mxu0 %v279
    %341 = vmatmul.bf16.gmra.mxu0 %v115
    %v342 = vpop.f32.mrf.mxu0
    %v343 = vadd.f32 %v329, %v342
    %v344 = vpop.f32.mrf.mxu0
    %v345 = vadd.f32 %v331, %v344
    %346 = vdwg.mxu0
    %347 = vmatpush.bf16.msra.mxu0 %v294
    %348 = vmatpush.bf16.msra.mxu0 %v293
    %349 = vmatpush.bf16.msra.mxu0 %v292
    %350 = vmatpush.bf16.msra.mxu0 %v291
    %351 = vmatpush.bf16.msra.mxu0 %v290
    %352 = vmatpush.bf16.msra.mxu0 %v289
    %353 = vmatpush.bf16.msra.mxu0 %v288
    %354 = vmatpush.bf16.msra.mxu0 %v287
    %355 = vmatmul.bf16.gmra.mxu0 %v121
    %v356 = vpop.f32.mrf.mxu0
    %v357 = vadd.f32 %v343, %v356
    %v358 = vpop.f32.mrf.mxu0
    %v359 = vadd.f32 %v345, %v358
    %360 = vdwg.mxu0
    %v361 = vmax.f32 %v357, 0.0
    %v362 = vmax.f32 %v359, 0.0
    %v363 = vpack.c.bf16 %v361, %v361
    %v364 = vpack.c.bf16 %v362, %v362
    %v367 = vunpack.c.l.b16 %v363
    %v368 = vunpack.c.l.b16 %v364
    %v369 = vpack.c.b16 %v367, %v367
    %v370 = vpack.c.b16 %v368, %v368
    %v372 = vshrl.u32 %v369, 16
    %v374 = vrot.slane %v372, 7
    %v375 = vshll.u32 %v369, 16
    %v377 = vor.u32 %v374, %v375
    %v379 = vshrl.u32 %v370, 16
    %v381 = vrot.slane %v379, 7
    %v382 = vshll.u32 %v370, 16
    %v384 = vor.u32 %v381, %v382
    %v387 = vsel %vm95, 0, %v377
    %v388 = vsel %vm95, 0, %v384
    %v389 = vrot.slane %v375, 1
    %v390 = vor.u32 %v372, %v389
    %v391 = vrot.slane %v382, 1
    %v392 = vor.u32 %v379, %v391
    %v395 = vsel %vm106, %v390, 0
    %v396 = vsel %vm106, %v392, 0
    %v399 = vunpack.c.l.b16 %v387
    %v400 = vunpack.c.l.b16 %v388
    %v401 = vpack.c.b16 %v400, %v399
    %v403 = vpack.c.b16 %v368, %v367
    %v407 = vunpack.c.l.b16 %v395
    %v408 = vunpack.c.l.b16 %v396
    %v409 = vpack.c.b16 %v408, %v407
    %v411 = vld [vmem:[#allocation7] sm:$0xf]
    %v412 = vld [vmem:[#allocation7 + $0x4] sm:$0xf]
    %v413 = vld [vmem:[#allocation7 + $0x8] sm:$0xf]
    %v414 = vld [vmem:[#allocation7 + $0xc] sm:$0xf]
    %v415 = vld [vmem:[#allocation7 + $0x10] sm:$0xf]
    %v416 = vld [vmem:[#allocation7 + $0x14] sm:$0xf]
    %v417 = vld [vmem:[#allocation7 + $0x18] sm:$0xf]
    %v418 = vld [vmem:[#allocation7 + $0x1c] sm:$0xf]
    %v419 = vld [vmem:[#allocation7 + $0x20] sm:$0xf]
    %v420 = vld [vmem:[#allocation7 + $0x24] sm:$0xf]
    %v421 = vld [vmem:[#allocation7 + $0x28] sm:$0xf]
    %v422 = vld [vmem:[#allocation7 + $0x2c] sm:$0xf]
    %v423 = vld [vmem:[#allocation7 + $0x30] sm:$0xf]
    %v424 = vld [vmem:[#allocation7 + $0x34] sm:$0xf]
    %v425 = vld [vmem:[#allocation7 + $0x38] sm:$0xf]
    %v426 = vld [vmem:[#allocation7 + $0x3c] sm:$0xf]
    %v427 = vld [vmem:[#allocation7 + $0x40] sm:$0xf]
    %v428 = vld [vmem:[#allocation7 + $0x44] sm:$0xf]
    %v429 = vld [vmem:[#allocation7 + $0x48] sm:$0xf]
    %v430 = vld [vmem:[#allocation7 + $0x4c] sm:$0xf]
    %v431 = vld [vmem:[#allocation7 + $0x50] sm:$0xf]
    %v432 = vld [vmem:[#allocation7 + $0x54] sm:$0xf]
    %v433 = vld [vmem:[#allocation7 + $0x58] sm:$0xf]
    %v434 = vld [vmem:[#allocation7 + $0x5c] sm:$0xf]
    %v435 = vld [vmem:[#allocation7 + $0x60] sm:$0xf]
    %v436 = vld [vmem:[#allocation7 + $0x64] sm:$0xf]
    %v437 = vld [vmem:[#allocation7 + $0x68] sm:$0xf]
    %v438 = vld [vmem:[#allocation7 + $0x6c] sm:$0xf]
    %v439 = vld [vmem:[#allocation7 + $0x70] sm:$0xf]
    %v440 = vld [vmem:[#allocation7 + $0x74] sm:$0xf]
    %v441 = vld [vmem:[#allocation7 + $0x78] sm:$0xf]
    %v442 = vld [vmem:[#allocation7 + $0x7c] sm:$0xf]
    %v443 = vld [vmem:[#allocation7 + $0x80] sm:$0xf]
    %v444 = vld [vmem:[#allocation7 + $0x84] sm:$0xf]
    %v445 = vld [vmem:[#allocation7 + $0x88] sm:$0xf]
    %v446 = vld [vmem:[#allocation7 + $0x8c] sm:$0xf]
    %v447 = vld [vmem:[#allocation7 + $0x90] sm:$0xf]
    %v448 = vld [vmem:[#allocation7 + $0x94] sm:$0xf]
    %v449 = vld [vmem:[#allocation7 + $0x98] sm:$0xf]
    %v450 = vld [vmem:[#allocation7 + $0x9c] sm:$0xf]
    %v451 = vld [vmem:[#allocation7 + $0xa0] sm:$0xf]
    %v452 = vld [vmem:[#allocation7 + $0xa4] sm:$0xf]
    %v453 = vld [vmem:[#allocation7 + $0xa8] sm:$0xf]
    %v454 = vld [vmem:[#allocation7 + $0xac] sm:$0xf]
    %v455 = vld [vmem:[#allocation7 + $0xb0] sm:$0xf]
    %v456 = vld [vmem:[#allocation7 + $0xb4] sm:$0xf]
    %v457 = vld [vmem:[#allocation7 + $0xb8] sm:$0xf]
    %v458 = vld [vmem:[#allocation7 + $0xbc] sm:$0xf]
    %v459 = vld [vmem:[%s4] sm:$0x1]
    %v461 = vperm.slane %v459, 0
    %v511 = vunpack.c.l.b16 %v411
    %v512 = vunpack.c.l.b16 %v412
    %v513 = vunpack.c.l.b16 %v413
    %v514 = vunpack.c.l.b16 %v414
    %v515 = vunpack.c.l.b16 %v415
    %v516 = vunpack.c.l.b16 %v416
    %v517 = vunpack.c.l.b16 %v417
    %v518 = vunpack.c.l.b16 %v418
    %v519 = vunpack.c.l.b16 %v419
    %v520 = vunpack.c.l.b16 %v420
    %v521 = vunpack.c.l.b16 %v421
    %v522 = vunpack.c.l.b16 %v422
    %v523 = vunpack.c.l.b16 %v423
    %v524 = vunpack.c.l.b16 %v424
    %v525 = vunpack.c.l.b16 %v425
    %v526 = vunpack.c.l.b16 %v426
    %v527 = vunpack.c.l.b16 %v427
    %v528 = vunpack.c.l.b16 %v428
    %v529 = vunpack.c.l.b16 %v429
    %v530 = vunpack.c.l.b16 %v430
    %v531 = vunpack.c.l.b16 %v431
    %v532 = vunpack.c.l.b16 %v432
    %v533 = vunpack.c.l.b16 %v433
    %v534 = vunpack.c.l.b16 %v434
    %v535 = vunpack.c.l.b16 %v435
    %v536 = vunpack.c.l.b16 %v436
    %v537 = vunpack.c.l.b16 %v437
    %v538 = vunpack.c.l.b16 %v438
    %v539 = vunpack.c.l.b16 %v439
    %v540 = vunpack.c.l.b16 %v440
    %v541 = vunpack.c.l.b16 %v441
    %v542 = vunpack.c.l.b16 %v442
    %v543 = vunpack.c.l.b16 %v443
    %v544 = vunpack.c.l.b16 %v444
    %v545 = vunpack.c.l.b16 %v445
    %v546 = vunpack.c.l.b16 %v446
    %v547 = vunpack.c.l.b16 %v447
    %v548 = vunpack.c.l.b16 %v448
    %v549 = vunpack.c.l.b16 %v449
    %v550 = vunpack.c.l.b16 %v450
    %v551 = vunpack.c.l.b16 %v451
    %v552 = vunpack.c.l.b16 %v452
    %v553 = vunpack.c.l.b16 %v453
    %v554 = vunpack.c.l.b16 %v454
    %v555 = vunpack.c.l.b16 %v455
    %v556 = vunpack.c.l.b16 %v456
    %v557 = vunpack.c.l.b16 %v457
    %v558 = vunpack.c.l.b16 %v458
    %v559 = vpack.c.b16 %v512, %v511
    %v560 = vpack.c.b16 %v514, %v513
    %v561 = vpack.c.b16 %v516, %v515
    %v562 = vpack.c.b16 %v518, %v517
    %v563 = vpack.c.b16 %v520, %v519
    %v564 = vpack.c.b16 %v522, %v521
    %v565 = vpack.c.b16 %v524, %v523
    %v566 = vpack.c.b16 %v526, %v525
    %v567 = vpack.c.b16 %v528, %v527
    %v568 = vpack.c.b16 %v530, %v529
    %v569 = vpack.c.b16 %v532, %v531
    %v570 = vpack.c.b16 %v534, %v533
    %v571 = vpack.c.b16 %v536, %v535
    %v572 = vpack.c.b16 %v538, %v537
    %v573 = vpack.c.b16 %v540, %v539
    %v574 = vpack.c.b16 %v542, %v541
    %v575 = vpack.c.b16 %v544, %v543
    %v576 = vpack.c.b16 %v546, %v545
    %v577 = vpack.c.b16 %v548, %v547
    %v578 = vpack.c.b16 %v550, %v549
    %v579 = vpack.c.b16 %v552, %v551
    %v580 = vpack.c.b16 %v554, %v553
    %v581 = vpack.c.b16 %v556, %v555
    %v582 = vpack.c.b16 %v558, %v557
    %607 = vmatpush.bf16.msra.mxu0 %v566
    %608 = vmatpush.bf16.msra.mxu0 %v565
    %609 = vmatpush.bf16.msra.mxu0 %v564
    %610 = vmatpush.bf16.msra.mxu0 %v563
    %611 = vmatpush.bf16.msra.mxu0 %v562
    %612 = vmatpush.bf16.msra.mxu0 %v561
    %613 = vmatpush.bf16.msra.mxu0 %v560
    %614 = vmatpush.bf16.msra.mxu0 %v559
    %615 = vmatmul.bf16.gmra.mxu0 %v401
    %v616 = vpop.f32.mrf.mxu0
    %v617 = vadd.f32 %v461, %v616
    %v618 = vpop.f32.mrf.mxu0
    %v619 = vadd.f32 %v461, %v618
    %620 = vdwg.mxu0
    %621 = vmatpush.bf16.msra.mxu0 %v574
    %622 = vmatpush.bf16.msra.mxu0 %v573
    %623 = vmatpush.bf16.msra.mxu0 %v572
    %624 = vmatpush.bf16.msra.mxu0 %v571
    %625 = vmatpush.bf16.msra.mxu0 %v570
    %626 = vmatpush.bf16.msra.mxu0 %v569
    %627 = vmatpush.bf16.msra.mxu0 %v568
    %628 = vmatpush.bf16.msra.mxu0 %v567
    %629 = vmatmul.bf16.gmra.mxu0 %v403
    %v630 = vpop.f32.mrf.mxu0
    %v631 = vadd.f32 %v617, %v630
    %v632 = vpop.f32.mrf.mxu0
    %v633 = vadd.f32 %v619, %v632
    %634 = vdwg.mxu0
    %635 = vmatpush.bf16.msra.mxu0 %v582
    %636 = vmatpush.bf16.msra.mxu0 %v581
    %637 = vmatpush.bf16.msra.mxu0 %v580
    %638 = vmatpush.bf16.msra.mxu0 %v579
    %639 = vmatpush.bf16.msra.mxu0 %v578
    %640 = vmatpush.bf16.msra.mxu0 %v577
    %641 = vmatpush.bf16.msra.mxu0 %v576
    %642 = vmatpush.bf16.msra.mxu0 %v575
    %643 = vmatmul.bf16.gmra.mxu0 %v409
    %v644 = vpop.f32.mrf.mxu0
    %v645 = vadd.f32 %v631, %v644
    %v646 = vpop.f32.mrf.mxu0
    %v647 = vadd.f32 %v633, %v646
    %648 = vdwg.mxu0
    %v649 = vunpack.c.l.bf16 %v69
    %v650 = vunpack.c.l.bf16 %v70
    %v651 = vadd.f32 %v645, %v649
    %v652 = vadd.f32 %v647, %v650
    %v653 = vmax.f32 %v651, 0.0
    %v654 = vmax.f32 %v652, 0.0
    %655 = vst [vmem:[#allocation8] sm:$0xff] %v653
    %656 = vst [vmem:[#allocation8 + $0x8] sm:$0xff] %v654
    // Predicated region
    $region34: #{tpu_custom_call.1} parent=1 // pred_check
      _
    $region35: #{tpu_custom_call.1} parent=1 // pred_check_branch
      %658 = sbr.rel (0) target = $region37
    $region36: #{tpu_custom_call.1} parent=1 // pred_region
      %660 = vsyncadd [#allocation4], 0
      %s661 = sshll.u32 [#allocation8], 4
      %s662 = int_to_ptr.vmem [resolvable:$true] %s661
      %s663 = sshll.u32 %s5, 4
      %s664 = int_to_ptr.hbm [resolvable:$true] %s663
      %669 = dma.vmem_to_hbm [thread:$0]  %s662, 256, %s664, [#allocation4], 128, 128, 8
    $region37: #{tpu_custom_call.1} parent=1 // pred_fallthru
      _
    // Predicated region
    $region38: #{tpu_custom_call.1} parent=1 // pred_check
      _
    $region39: #{tpu_custom_call.1} parent=1 // pred_check_branch
      %671 = sbr.rel (0) target = $region41
    $region40: #{tpu_custom_call.1} parent=1 // pred_region
      %673 = dma.done [#allocation4], 256
    $region41: #{tpu_custom_call.1} parent=1 // pred_fallthru
      _
    %674 = vsyncpa [#allocation3], 1
    %675 = vsyncpa [#allocation6], 1
    %676 = vsyncpa [#allocation4], 1

</llo_original>
